<compile_context>
chip_gen: v7x
topology: tpu7x:2x2x1
jax: 0.10.0
libtpu: 0.0.40
codegen_flags: <defaults>
</compile_context>

<pallas_src>
import jax
import jax.numpy as jnp
import numpy as np
from jax.experimental import pallas as pl
from jax.experimental.pallas import tpu as pltpu


def _gcn_kernel(x_ref, wadj_ref, badj_ref, w_ref, bias_ref, out_ref):
    # x_ref:    (Bt, N, F)  f32 block of graphs
    # wadj_ref: (F, 2)      fused adj_transform weight (col 0 -> "j" term, col 1 -> "i" term)
    # badj_ref: (1,)        adj_transform bias, SMEM scalar
    # w_ref:    (F, Opad)   GCN weight (possibly bf16, zero-padded to lane-dense Opad)
    # bias_ref: (1, Opad)   GCN bias (zero-padded, f32)
    # out_ref:  (Bt, N, Opad)
    bt, n, f = x_ref.shape
    o = w_ref.shape[1]

    x2 = x_ref[...].reshape(bt * n, f)                               # (Bt*N, F)

    # Fused adjacency projections (always f32): one width-2 MXU matmul.
    s = jnp.dot(x2, wadj_ref[...], preferred_element_type=jnp.float32)
    s = s.reshape(bt, n, 2)
    s1 = s[:, :, 0:1]                                                # (Bt, N, 1)  x[b,j]·w1
    s2 = s[:, :, 1:2]                                                # (Bt, N, 1)  x[b,i]·w2
    b_adj = badj_ref[0]                                              # scalar (SMEM)

    # Closed-form degree of the rank-1 adjacency, then clamp(min=1)^(-1/2).
    sum_s1 = jnp.sum(s1, axis=1, keepdims=True)                      # (Bt, 1, 1)
    deg = n * s2 + sum_s1 + n * b_adj                                # (Bt, N, 1)
    d = jax.lax.rsqrt(jnp.maximum(deg, 1.0))                         # (Bt, N, 1)

    # Feature transform on the MXU (optionally bf16 inputs, f32 accumulation).
    h = jnp.dot(x2.astype(w_ref.dtype), w_ref[...],
                preferred_element_type=jnp.float32)                  # (Bt*N, Opad)
    h = h.reshape(bt, n, o)

    # adjn @ h without materializing adjn: two weighted column reductions.
    dh = d * h                                                       # (Bt, N, Opad)
    col_dh = jnp.sum(dh, axis=1, keepdims=True)                      # (Bt, 1, Opad)
    col_w = jnp.sum((s1 + b_adj) * dh, axis=1, keepdims=True)        # (Bt, 1, Opad)

    # Factored epilogue: d * (s2*col_dh + col_w) + bias, then ReLU.
    out = d * (s2 * col_dh + col_w) + bias_ref[...]                  # (Bt, N, Opad)
    out_ref[...] = jnp.maximum(out, 0.0)


def gcn_forward(x, wadj, badj, weight, bias, *, block_batch=None,
                compute_dtype=jnp.float32):
    """x: (B,N,F) f32; wadj: (2F,1); badj: (1,1); weight: (F,O); bias: (1,O)."""
    B, N, F = x.shape
    O = weight.shape[1]

    # Lane-dense output: pad O up to a multiple of 128 so output stores fill
    # whole vregs (no masked vst), then slice back outside the kernel.
    O_pad = ((O + 127) // 128) * 128
    if O_pad != O:
        weight = jnp.pad(weight, ((0, 0), (0, O_pad - O)))
        bias = jnp.pad(bias, ((0, 0), (0, O_pad - O)))
    weight = weight.astype(compute_dtype)
    bias = bias.astype(jnp.float32)

    # Fuse the two width-1 adjacency dots into one width-2 matmul.
    # wadj rows [:F] act on x[b, j] (w1), rows [F:] act on x[b, i] (w2).
    wadj2 = jnp.transpose(wadj.reshape(2, F)).astype(jnp.float32)     # (F, 2)
    badj_s = badj.reshape(1).astype(jnp.float32)                      # SMEM scalar

    if block_batch is None:
        # Batch graphs per grid step to amortize per-step overhead, but keep
        # >=2 grid steps when possible so dimension_semantics=("parallel",)
        # can shard the batch across v7x's two TensorCores.
        block_batch = 1
        target_rows = 1024
        for bt in range(1, B + 1):
            if B % bt == 0 and bt * N <= target_rows and B // bt >= min(2, B):
                block_batch = bt
    assert B % block_batch == 0
    grid = (B // block_batch,)

    out = pl.pallas_call(
        _gcn_kernel,
        out_shape=jax.ShapeDtypeStruct((B, N, O_pad), jnp.float32),
        grid_spec=pltpu.PrefetchScalarGridSpec(
            num_scalar_prefetch=0,
            grid=grid,
            in_specs=[
                pl.BlockSpec((block_batch, N, F), lambda g: (g, 0, 0)),   # x
                pl.BlockSpec((F, 2), lambda g: (0, 0)),                   # fused adj weight
                pl.BlockSpec(memory_space=pltpu.MemorySpace.SMEM),        # adj bias scalar
                pl.BlockSpec((F, O_pad), lambda g: (0, 0)),               # GCN weight
                pl.BlockSpec((1, O_pad), lambda g: (0, 0)),               # GCN bias
            ],
            out_specs=pl.BlockSpec((block_batch, N, O_pad), lambda g: (g, 0, 0)),
        ),
        compiler_params=pltpu.CompilerParams(
            dimension_semantics=("parallel",),
            vmem_limit_bytes=32 * 1024 * 1024,
        ),
    )(x, wadj2, badj_s, weight, bias)

    return out[..., :O] if O_pad != O else out


def gcn_reference(x, wadj, badj, weight, bias):
    # Pure-JAX reference mirroring the PyTorch forward literally.
    B, N, F = x.shape
    tmp = jnp.broadcast_to(x[:, None, :, :], (B, N, N, F))           # tmp[b,i,j] = x[b,j]
    cat = jnp.concatenate((tmp, jnp.swapaxes(tmp, 1, 2)), axis=-1)   # (B,N,N,2F)
    adj = jnp.einsum("bijk,k->bij", cat, wadj[:, 0]) + badj[0, 0]
    h = x @ weight
    deg_inv_sqrt = jnp.maximum(adj.sum(-1), 1.0) ** -0.5
    adj = deg_inv_sqrt[:, :, None] * adj * deg_inv_sqrt[:, None, :]
    out = adj @ h + bias[0]
    return jnp.maximum(out, 0.0)


if __name__ == "__main__":
    B, N, F, O = 2, 8, 16, 32

    key = jax.random.PRNGKey(0)
    k_x, k_wa, k_ba, k_w, k_b = jax.random.split(key, 5)

    x = jax.random.normal(k_x, (B, N, F), dtype=jnp.float32)

    # adj_transform = nn.Linear(2F, 1): uniform init like PyTorch default
    bound_w = 1.0 / np.sqrt(2 * F)
    wadj = jax.random.uniform(k_wa, (2 * F, 1), jnp.float32, -bound_w, bound_w)
    badj = jax.random.uniform(k_ba, (1, 1), jnp.float32, -bound_w, bound_w)

    # weight: xavier_normal_(F, O); bias: normal_()
    xavier_std = np.sqrt(2.0 / (F + O))
    weight = jax.random.normal(k_w, (F, O), dtype=jnp.float32) * xavier_std
    bias = jax.random.normal(k_b, (1, O), dtype=jnp.float32)

    # f32 path: strict check against the literal reference.
    out = jax.block_until_ready(gcn_forward(x, wadj, badj, weight, bias))
    ref = gcn_reference(x, wadj, badj, weight, bias)
    np.testing.assert_allclose(np.asarray(out), np.asarray(ref), rtol=3e-4, atol=3e-4)

    # bf16 MXU path (v6e/v7x): bf16 feature-matmul inputs, f32 accumulation;
    # adjacency projection / degree normalization stays f32.
    out_bf16 = jax.block_until_ready(
        gcn_forward(x, wadj, badj, weight, bias, compute_dtype=jnp.bfloat16))
    np.testing.assert_allclose(np.asarray(out_bf16), np.asarray(ref),
                               rtol=1e-1, atol=1e-1)

    print("KERNEL_OK")
</pallas_src>

<mosaic_0001>
module attributes {stable_mosaic.version = 11 : i64} {
  func.func @_gcn_kernel(%arg0: i32, %arg1: memref<1x8x16xf32, #tpu.memory_space<vmem>>, %arg2: memref<16x2xf32, #tpu.memory_space<vmem>>, %arg3: memref<1xf32, #tpu.memory_space<smem>>, %arg4: memref<16x128xf32, #tpu.memory_space<vmem>>, %arg5: memref<1x128xf32, #tpu.memory_space<vmem>>, %arg6: memref<1x8x128xf32, #tpu.memory_space<vmem>>) attributes {dimension_semantics = [#tpu.dimension_semantics<parallel>], iteration_bounds = array<i64: 2>, scalar_prefetch = 0 : i64, scratch_operands = 0 : i64, tpu.core_type = #tpu.core_type<tc>, window_params = [{transform_indices = @transform_0, window_bounds = array<i64: 1, 8, 16>}, {pipeline_mode = #tpu.pipeline_mode<synchronous>, transform_indices = @transform_1, window_bounds = array<i64: 16, 2>}, {transform_indices = @transform_2, window_bounds = array<i64: 1>}, {pipeline_mode = #tpu.pipeline_mode<synchronous>, transform_indices = @transform_3, window_bounds = array<i64: 16, 128>}, {pipeline_mode = #tpu.pipeline_mode<synchronous>, transform_indices = @transform_4, window_bounds = array<i64: 1, 128>}, {transform_indices = @transform_5, window_bounds = array<i64: 1, 8, 128>}]} {
    %c0 = arith.constant 0 : index
    %c0_0 = arith.constant 0 : index
    %c0_1 = arith.constant 0 : index
    %0 = vector.load %arg1[%c0, %c0_0, %c0_1] : memref<1x8x16xf32, #tpu.memory_space<vmem>>, vector<1x8x16xf32>
    %1 = vector.shape_cast %0 : vector<1x8x16xf32> to vector<8x16xf32>
    %c0_2 = arith.constant 0 : index
    %c0_3 = arith.constant 0 : index
    %2 = vector.load %arg2[%c0_2, %c0_3] : memref<16x2xf32, #tpu.memory_space<vmem>>, vector<16x2xf32>
    %cst = arith.constant dense<0.000000e+00> : vector<8x2xf32>
    %3 = tpu.matmul %1, %2, %cst {dimension_numbers = #tpu.dot_dimension_numbers<[1], [0], [0], [1], [0, 0, 1, 1], [], []>} : vector<8x16xf32>, vector<16x2xf32>, vector<8x2xf32> -> vector<8x2xf32>
    %4 = vector.shape_cast %3 : vector<8x2xf32> to vector<1x8x2xf32>
    %5 = vector.extract_strided_slice %4 {offsets = [0, 0, 0], sizes = [1, 8, 1], strides = [1, 1, 1]} : vector<1x8x2xf32> to vector<1x8x1xf32>
    %6 = vector.extract_strided_slice %4 {offsets = [0, 0, 1], sizes = [1, 8, 1], strides = [1, 1, 1]} : vector<1x8x2xf32> to vector<1x8x1xf32>
    %c0_4 = arith.constant 0 : index
    %7 = memref.load %arg3[%c0_4] : memref<1xf32, #tpu.memory_space<smem>>
    %cst_5 = arith.constant dense<0.000000e+00> : vector<1x1xf32>
    %8 = vector.multi_reduction <add>, %5, %cst_5 [1] : vector<1x8x1xf32> to vector<1x1xf32>
    %9 = vector.shape_cast %8 : vector<1x1xf32> to vector<1x1x1xf32>
    %cst_6 = arith.constant 8.000000e+00 : f32
    %10 = vector.broadcast %cst_6 : f32 to vector<1x8x1xf32>
    %11 = arith.mulf %10, %6 : vector<1x8x1xf32>
    %12 = vector.broadcast %9 : vector<1x1x1xf32> to vector<1x8x1xf32>
    %13 = arith.addf %11, %12 : vector<1x8x1xf32>
    %cst_7 = arith.constant 8.000000e+00 : f32
    %14 = arith.mulf %cst_7, %7 : f32
    %15 = vector.broadcast %14 : f32 to vector<1x8x1xf32>
    %16 = arith.addf %13, %15 : vector<1x8x1xf32>
    %cst_8 = arith.constant 1.000000e+00 : f32
    %17 = vector.broadcast %cst_8 : f32 to vector<1x8x1xf32>
    %18 = arith.maximumf %16, %17 : vector<1x8x1xf32>
    %19 = math.rsqrt %18 : vector<1x8x1xf32>
    %c0_9 = arith.constant 0 : index
    %c0_10 = arith.constant 0 : index
    %20 = vector.load %arg4[%c0_9, %c0_10] : memref<16x128xf32, #tpu.memory_space<vmem>>, vector<16x128xf32>
    %cst_11 = arith.constant dense<0.000000e+00> : vector<8x128xf32>
    %21 = tpu.matmul %1, %20, %cst_11 {dimension_numbers = #tpu.dot_dimension_numbers<[1], [0], [0], [1], [0, 0, 1, 1], [], []>} : vector<8x16xf32>, vector<16x128xf32>, vector<8x128xf32> -> vector<8x128xf32>
    %22 = vector.shape_cast %21 : vector<8x128xf32> to vector<1x8x128xf32>
    %23 = vector.broadcast %19 : vector<1x8x1xf32> to vector<1x8x128xf32>
    %24 = arith.mulf %23, %22 : vector<1x8x128xf32>
    %cst_12 = arith.constant dense<0.000000e+00> : vector<1x128xf32>
    %25 = vector.multi_reduction <add>, %24, %cst_12 [1] : vector<1x8x128xf32> to vector<1x128xf32>
    %26 = vector.shape_cast %25 : vector<1x128xf32> to vector<1x1x128xf32>
    %27 = vector.broadcast %7 : f32 to vector<1x8x1xf32>
    %28 = arith.addf %5, %27 : vector<1x8x1xf32>
    %29 = vector.broadcast %28 : vector<1x8x1xf32> to vector<1x8x128xf32>
    %30 = arith.mulf %29, %24 : vector<1x8x128xf32>
    %cst_13 = arith.constant dense<0.000000e+00> : vector<1x128xf32>
    %31 = vector.multi_reduction <add>, %30, %cst_13 [1] : vector<1x8x128xf32> to vector<1x128xf32>
    %32 = vector.shape_cast %31 : vector<1x128xf32> to vector<1x1x128xf32>
    %33 = vector.broadcast %6 : vector<1x8x1xf32> to vector<1x8x128xf32>
    %34 = vector.broadcast %26 : vector<1x1x128xf32> to vector<1x8x128xf32>
    %35 = arith.mulf %33, %34 : vector<1x8x128xf32>
    %36 = vector.broadcast %32 : vector<1x1x128xf32> to vector<1x8x128xf32>
    %37 = arith.addf %35, %36 : vector<1x8x128xf32>
    %38 = vector.broadcast %19 : vector<1x8x1xf32> to vector<1x8x128xf32>
    %39 = arith.mulf %38, %37 : vector<1x8x128xf32>
    %c0_14 = arith.constant 0 : index
    %c0_15 = arith.constant 0 : index
    %40 = vector.load %arg5[%c0_14, %c0_15] : memref<1x128xf32, #tpu.memory_space<vmem>>, vector<1x128xf32>
    %41 = vector.shape_cast %40 : vector<1x128xf32> to vector<1x1x128xf32>
    %42 = vector.broadcast %41 : vector<1x1x128xf32> to vector<1x8x128xf32>
    %43 = arith.addf %39, %42 : vector<1x8x128xf32>
    %cst_16 = arith.constant 0.000000e+00 : f32
    %44 = vector.broadcast %cst_16 : f32 to vector<1x8x128xf32>
    %45 = arith.maximumf %43, %44 : vector<1x8x128xf32>
    %c0_17 = arith.constant 0 : index
    %c0_18 = arith.constant 0 : index
    %c0_19 = arith.constant 0 : index
    %46 = vector.load %arg6[%c0_17, %c0_18, %c0_19] : memref<1x8x128xf32, #tpu.memory_space<vmem>>, vector<1x8x128xf32>
    tpu.vector_store %arg6[%c0_17, %c0_18, %c0_19], %45 {strides = array<i32>} : memref<1x8x128xf32, #tpu.memory_space<vmem>>, vector<1x8x128xf32>,
    return
  }
  func.func @transform_0(%arg0: i32) -> (i32, i32, i32) {
    %c0_i32 = arith.constant 0 : i32
    %c0_i32_0 = arith.constant 0 : i32
    %c0_i32_1 = arith.constant 0 : i32
    return %arg0, %c0_i32, %c0_i32_0 : i32, i32, i32
  }
  func.func @transform_1(%arg0: i32) -> (i32, i32) {
    %c0_i32 = arith.constant 0 : i32
    %c0_i32_0 = arith.constant 0 : i32
    %c0_i32_1 = arith.constant 0 : i32
    return %c0_i32, %c0_i32_0 : i32, i32
  }
  func.func @transform_2(%arg0: i32) -> i32 {
    %c0_i32 = arith.constant 0 : i32
    %c0_i32_0 = arith.constant 0 : i32
    return %c0_i32 : i32
  }
  func.func @transform_3(%arg0: i32) -> (i32, i32) {
    %c0_i32 = arith.constant 0 : i32
    %c0_i32_0 = arith.constant 0 : i32
    %c0_i32_1 = arith.constant 0 : i32
    return %c0_i32, %c0_i32_0 : i32, i32
  }
  func.func @transform_4(%arg0: i32) -> (i32, i32) {
    %c0_i32 = arith.constant 0 : i32
    %c0_i32_0 = arith.constant 0 : i32
    %c0_i32_1 = arith.constant 0 : i32
    return %c0_i32, %c0_i32_0 : i32, i32
  }
  func.func @transform_5(%arg0: i32) -> (i32, i32, i32) {
    %c0_i32 = arith.constant 0 : i32
    %c0_i32_0 = arith.constant 0 : i32
    %c0_i32_1 = arith.constant 0 : i32
    return %arg0, %c0_i32, %c0_i32_0 : i32, i32, i32
  }
}

</mosaic_0001>

<llo_original>
// kernel: tpu_custom_call.1
$region0: #{tpu_custom_call.1}
  #allocation0 [shape = 'u32[]', space=smem, size = 0x4, offset = 0x4, fixed_abs, tag = 'smem constant byte address 0x4 - core index']
  #allocation1 [shape = 'u32[144,128]{1,0:T(1,128)}', space=vmem, size = 0x12000, scoped, tag = 'internal scratch']
  #allocation2 [shape = 'f32[1]{0:T(128)S(6)}', space=smem, size = 0x200, scoped, tag = 'scoped memory for tpu_custom_call.1']
  %s0 = inlined_call_operand.vmem [shape: f32[2,8,16], index: 0, kind: input, shape index: {}]
  %s1 = inlined_call_operand.vmem [shape: f32[16,2], index: 1, kind: input, shape index: {}]
  %s2 = inlined_call_operand.<no memory space> [shape: f32[1], index: 2, kind: input, shape index: {}]
  %s3 = inlined_call_operand.hbm [shape: f32[16,128], index: 3, kind: input, shape index: {}]
  %s4 = inlined_call_operand.vmem [shape: f32[1,128], index: 4, kind: input, shape index: {}]
  %s5 = inlined_call_operand.hbm [shape: f32[2,8,128], index: 5, kind: output, shape index: {}]
  %s6 = sld [smem:[#allocation0]]
  $region57: #{tpu_custom_call.1} parent=0
    _
  %s8 = ssub.s32 1, %s6
  %s9 = scalar_select 0, %s8, %s6
  %10 = sst [smem:[#allocation2]] %s2
  $region1: #{tpu_custom_call.1} parent=0
    #allocation3 [shape = 'u8[8192]{0}', space=vmem, size = 0x2000, scoped, tag = 'input window, operand 3, single buffered']
    #allocation4 [shape = 's32[2]{0}', space=sflag, size = 0x8, scoped, tag = 'scoped memory for tpu_custom_call.1']
    #allocation5 [shape = 's32[2]{0}', space=sflag, size = 0x8, scoped, tag = 'scoped memory for tpu_custom_call.1']
    #allocation6 [shape = 'u8[8192]{0}', space=vmem, size = 0x2000, scoped, tag = 'output window, operand 0']
    %11 = vsyncpa [#allocation4], 0
    %12 = vsyncpa [#allocation5], 0
    %s13 = scalar_lea.sflag [#allocation5], 1
    %14 = vsyncpa %s13, 0
    loop: start=0, step=1, limit=4
    $region2: #{tpu_custom_call.1} parent=1 // loop_pre_header
      _
    $region3: #{tpu_custom_call.1} parent=1 // loop_header
      %s16 = sphi 0, %s20
      %p17 = scmp.ge.s32.totalorder %s16, 4
      %s26 = sphi 0, %s28
      %s29 = sphi 0, %s26
      %s30 = sphi 0, %s29
      %s46 = sphi 0, %s30
      %s50 = sphi 0, %s50
      %s52 = sphi 0, %s50
      %s53 = sphi 0, %s52
      %s67 = sphi 0, %s53
      %s71 = sphi 0, %s71
      %s73 = sphi 0, %s71
      %s74 = sphi 0, %s73
      %s88 = sphi 0, %s74
      %s92 = sphi 0, %s92
      %s94 = sphi 0, %s92
      %s95 = sphi 0, %s94
      %s109 = sphi 0, %s95
      %s113 = sphi 0, %s113
      %s115 = sphi 0, %s113
      %s116 = sphi 0, %s115
      %s130 = sphi 0, %s116
      %s136 = sphi 0, %s138
      %s139 = sphi 0, %s136
      %s140 = sphi 0, %s139
      %s156 = sphi 0, %s140
    $region4: #{tpu_custom_call.1} parent=1 // loop_header_branch
      %19 = sbr.rel (%p17) target = $region8
    $region5: #{tpu_custom_call.1} parent=1 // loop_body
      %s21 = ssub.s32 %s16, 1
      %s22 = ssub.s32 %s16, 2
      %s23 = sadd.s32 %s16, 1
      %s24 = ssub.s32 %s16, %s23
      %p25 = scmp.eq.s32.totalorder %s24, 0
      %s27 = sadd.s32 %s26, 1
      %s28 = scalar_select %p25, %s26, %s27
      %p31 = pneg %p25
      %p32 = scmp.eq.s32.totalorder %s16, 1
      %p33 = por %p31, %p32
      %p34 = scmp.ne.s32.totalorder %s26, %s29
      %p35 = scmp.eq.s32.totalorder %s16, 0
      %p36 = por %p34, %p35
      %p37 = scmp.ne.s32.totalorder %s26, %s29
      %p38 = scmp.eq.s32.totalorder %s21, 1
      %p39 = por %p37, %p38
      %p40 = scmp.ne.s32.totalorder %s29, %s30
      %p41 = scmp.eq.s32.totalorder %s21, 0
      %p42 = por %p40, %p41
      %p43 = scmp.ne.s32.totalorder %s29, %s30
      %p44 = scmp.eq.s32.totalorder %s22, 1
      %p45 = por %p43, %p44
      %p47 = scmp.ne.s32.totalorder %s30, %s46
      %p48 = scmp.eq.s32.totalorder %s22, 0
      %p49 = por %p47, %p48
      %s51 = sadd.s32 %s50, 1
      %p54 = scmp.eq.s32.totalorder %s16, 1
      %p55 = scmp.ne.s32.totalorder %s50, %s52
      %p56 = scmp.eq.s32.totalorder %s16, 0
      %p57 = por %p55, %p56
      %p58 = scmp.ne.s32.totalorder %s50, %s52
      %p59 = scmp.eq.s32.totalorder %s21, 1
      %p60 = por %p58, %p59
      %p61 = scmp.ne.s32.totalorder %s52, %s53
      %p62 = scmp.eq.s32.totalorder %s21, 0
      %p63 = por %p61, %p62
      %p64 = scmp.ne.s32.totalorder %s52, %s53
      %p65 = scmp.eq.s32.totalorder %s22, 1
      %p66 = por %p64, %p65
      %p68 = scmp.ne.s32.totalorder %s53, %s67
      %p69 = scmp.eq.s32.totalorder %s22, 0
      %p70 = por %p68, %p69
      %s72 = sadd.s32 %s71, 1
      %p75 = scmp.eq.s32.totalorder %s16, 1
      %p76 = scmp.ne.s32.totalorder %s71, %s73
      %p77 = scmp.eq.s32.totalorder %s16, 0
      %p78 = por %p76, %p77
      %p79 = scmp.ne.s32.totalorder %s71, %s73
      %p80 = scmp.eq.s32.totalorder %s21, 1
      %p81 = por %p79, %p80
      %p82 = scmp.ne.s32.totalorder %s73, %s74
      %p83 = scmp.eq.s32.totalorder %s21, 0
      %p84 = por %p82, %p83
      %p85 = scmp.ne.s32.totalorder %s73, %s74
      %p86 = scmp.eq.s32.totalorder %s22, 1
      %p87 = por %p85, %p86
      %p89 = scmp.ne.s32.totalorder %s74, %s88
      %p90 = scmp.eq.s32.totalorder %s22, 0
      %p91 = por %p89, %p90
      %s93 = sadd.s32 %s92, 1
      %p96 = scmp.eq.s32.totalorder %s16, 1
      %p97 = scmp.ne.s32.totalorder %s92, %s94
      %p98 = scmp.eq.s32.totalorder %s16, 0
      %p99 = por %p97, %p98
      %p100 = scmp.ne.s32.totalorder %s92, %s94
      %p101 = scmp.eq.s32.totalorder %s21, 1
      %p102 = por %p100, %p101
      %p103 = scmp.ne.s32.totalorder %s94, %s95
      %p104 = scmp.eq.s32.totalorder %s21, 0
      %p105 = por %p103, %p104
      %p106 = scmp.ne.s32.totalorder %s94, %s95
      %p107 = scmp.eq.s32.totalorder %s22, 1
      %p108 = por %p106, %p107
      %p110 = scmp.ne.s32.totalorder %s95, %s109
      %p111 = scmp.eq.s32.totalorder %s22, 0
      %p112 = por %p110, %p111
      %s114 = sadd.s32 %s113, 1
      %p117 = scmp.eq.s32.totalorder %s16, 1
      %p118 = scmp.ne.s32.totalorder %s113, %s115
      %p119 = scmp.eq.s32.totalorder %s16, 0
      %p120 = por %p118, %p119
      %p121 = scmp.ne.s32.totalorder %s113, %s115
      %p122 = scmp.eq.s32.totalorder %s21, 1
      %p123 = por %p121, %p122
      %p124 = scmp.ne.s32.totalorder %s115, %s116
      %p125 = scmp.eq.s32.totalorder %s21, 0
      %p126 = por %p124, %p125
      %p127 = scmp.ne.s32.totalorder %s115, %s116
      %p128 = scmp.eq.s32.totalorder %s22, 1
      %p129 = por %p127, %p128
      %p131 = scmp.ne.s32.totalorder %s116, %s130
      %p132 = scmp.eq.s32.totalorder %s22, 0
      %p133 = por %p131, %p132
      %s134 = ssub.s32 %s16, %s23
      %p135 = scmp.eq.s32.totalorder %s134, 0
      %s137 = sadd.s32 %s136, 1
      %s138 = scalar_select %p135, %s136, %s137
      %p141 = pneg %p135
      %p142 = scmp.eq.s32.totalorder %s16, 1
      %p143 = por %p141, %p142
      %p144 = scmp.ne.s32.totalorder %s136, %s139
      %p145 = scmp.eq.s32.totalorder %s16, 0
      %p146 = por %p144, %p145
      %p147 = scmp.ne.s32.totalorder %s136, %s139
      %p148 = scmp.eq.s32.totalorder %s21, 1
      %p149 = por %p147, %p148
      %p150 = scmp.ne.s32.totalorder %s139, %s140
      %p151 = scmp.eq.s32.totalorder %s21, 0
      %p152 = por %p150, %p151
      %p153 = scmp.ne.s32.totalorder %s139, %s140
      %p154 = scmp.eq.s32.totalorder %s22, 1
      %p155 = por %p153, %p154
      %p157 = scmp.ne.s32.totalorder %s140, %s156
      %p158 = scmp.eq.s32.totalorder %s22, 0
      %p159 = por %p157, %p158
      %p160 = scmp.le.s32.totalorder 1, %s16
      %p161 = scmp.lt.s32.totalorder %s16, 3
      %p162 = pnand %p160, %p161
      %p163 = pneg %p162
      // Predicated region
      $region9: #{tpu_custom_call.1} parent=5 // pred_check
        _
      $region10: #{tpu_custom_call.1} parent=5 // pred_check_branch
        %165 = sbr.rel (%p162) target = $region12
      $region11: #{tpu_custom_call.1} parent=5 // pred_region
        %s166 = ssub.s32 %s16, 1
        // Predicated region
        $region13: #{tpu_custom_call.1} parent=11 // pred_check
          %p167 = pneg %p63
        $region14: #{tpu_custom_call.1} parent=11 // pred_check_branch
          %169 = sbr.rel (%p167) target = $region16
        $region15: #{tpu_custom_call.1} parent=11 // pred_region
          _
        $region16: #{tpu_custom_call.1} parent=11 // pred_fallthru
          _
        // Predicated region
        $region17: #{tpu_custom_call.1} parent=11 // pred_check
          %p170 = pneg %p84
        $region18: #{tpu_custom_call.1} parent=11 // pred_check_branch
          %172 = sbr.rel (%p170) target = $region20
        $region19: #{tpu_custom_call.1} parent=11 // pred_region
          _
        $region20: #{tpu_custom_call.1} parent=11 // pred_fallthru
          _
        // Predicated region
        $region21: #{tpu_custom_call.1} parent=11 // pred_check
          %p173 = pneg %p105
        $region22: #{tpu_custom_call.1} parent=11 // pred_check_branch
          %175 = sbr.rel (%p173) target = $region24
        $region23: #{tpu_custom_call.1} parent=11 // pred_region
          %s177 = ssub.s32 256, 256
          %178 = vsyncadd [#allocation4], %s177
          %s179 = sshll.u32 [#allocation3], 4
          %s180 = int_to_ptr.vmem [resolvable:$true] %s179
          %185 = dma.hbm_to_vmem [thread:$0]  %s3, 256, %s180, [#allocation4], 128, 128, 8
        $region24: #{tpu_custom_call.1} parent=11 // pred_fallthru
          _
        // Predicated region
        $region25: #{tpu_custom_call.1} parent=11 // pred_check
          %p186 = pneg %p126
        $region26: #{tpu_custom_call.1} parent=11 // pred_check_branch
          %188 = sbr.rel (%p186) target = $region28
        $region27: #{tpu_custom_call.1} parent=11 // pred_region
          _
        $region28: #{tpu_custom_call.1} parent=11 // pred_fallthru
          _
      $region12: #{tpu_custom_call.1} parent=5 // pred_fallthru
        _
      %p189 = scmp.lt.s32.totalorder %s16, 2
      // Predicated region
      $region29: #{tpu_custom_call.1} parent=5 // pred_check
        %p190 = pneg %p189
      $region30: #{tpu_custom_call.1} parent=5 // pred_check_branch
        %192 = sbr.rel (%p190) target = $region32
      $region31: #{tpu_custom_call.1} parent=5 // pred_region
        // Predicated region
        $region33: #{tpu_custom_call.1} parent=31 // pred_check
          %p193 = pneg %p36
        $region34: #{tpu_custom_call.1} parent=31 // pred_check_branch
          %195 = sbr.rel (%p193) target = $region36
        $region35: #{tpu_custom_call.1} parent=31 // pred_region
          %p196 = scmp.lt.s32.totalorder %s16, 1
          %s197 = scalar_select %p196, %s16, 1
          %s198 = smul.addr %s197, 8
          %s199 = scalar_lea.vmem %s0, %s198
        $region36: #{tpu_custom_call.1} parent=31 // pred_fallthru
          _
      $region32: #{tpu_custom_call.1} parent=5 // pred_fallthru
        _
      %p200 = scmp.le.s32.totalorder 1, %s16
      %p201 = scmp.lt.s32.totalorder %s16, 3
      %p202 = pnand %p200, %p201
      %p203 = pneg %p202
      // Predicated region
      $region37: #{tpu_custom_call.1} parent=5 // pred_check
        _
      $region38: #{tpu_custom_call.1} parent=5 // pred_check_branch
        %205 = sbr.rel (%p202) target = $region40
      $region39: #{tpu_custom_call.1} parent=5 // pred_region
        %s206 = ssub.s32 %s16, 1
        // Predicated region
        $region41: #{tpu_custom_call.1} parent=39 // pred_check
          %p207 = pneg %p105
        $region42: #{tpu_custom_call.1} parent=39 // pred_check_branch
          %209 = sbr.rel (%p207) target = $region44
        $region43: #{tpu_custom_call.1} parent=39 // pred_region
          %210 = dma.done [#allocation4], 256
        $region44: #{tpu_custom_call.1} parent=39 // pred_fallthru
          _
        %p211 = scmp.lt.s32.totalorder %s21, 1
        %s212 = scalar_select %p211, %s21, 1
        %s213 = smul.addr %s212, 8
        %s214 = scalar_lea.vmem %s0, %s213
        %p215 = pneg %p42
        %p216 = pneg %p39
        %p217 = pneg %p63
        %p218 = pneg %p60
        %p219 = pneg %p84
        %p220 = pneg %p81
        %p221 = pneg %p105
        %p222 = pneg %p102
        %p223 = pneg %p126
        %p224 = pneg %p123
        %p225 = pneg %p152
        %p226 = pneg %p149
        %s227 = sand.u32 %s139, 1
        %s228 = scalar_lea.sflag [#allocation5], %s227
        %s229 = sand.u32 %s139, 1
        %s230 = smul.addr %s229, 8
        %s231 = scalar_lea.vmem [#allocation6], %s230
        %p232 = scmp.lt.s32.totalorder %s21, 1
        %s233 = scalar_select %p232, %s21, 1
        %s234 = smul.addr %s233, 8
        %s235 = scalar_lea.vmem %s0, %s234
        %v236 = vld [vmem:[%s235] sm:$0xff]
        %v237 = vld [vmem:[%s1] sm:$0xff]
        %v238 = vld [vmem:[%s1 + $0x8] sm:$0xff]
        %vm239 = vcmask 130048
        %v241 = vsel %vm239, %v236, 0
        %243 = vmatprep.subr.mxu0 0.0
        %244 = vmatpush1.msra.mxu0 %v237
        %245 = vmatprep.subr.mxu0 0.0
        %246 = vmatpush1.msra.mxu0 %v238
        %247 = vmatprep.subr.mxu0 0.0
        %248 = vmatpush1.msra.mxu0 0.0
        %249 = vmatprep.subr.mxu0 0.0
        %250 = vmatpush1.msra.mxu0 0.0
        %251 = vmatprep.subr.mxu0 0.0
        %252 = vmatpush1.msra.mxu0 0.0
        %253 = vmatprep.subr.mxu0 0.0
        %254 = vmatpush1.msra.mxu0 0.0
        %255 = vmatprep.subr.mxu0 0.0
        %256 = vmatpush1.msra.mxu0 0.0
        %257 = vmatprep.subr.mxu0 0.0
        %258 = vmatpush1.msra.mxu0 0.0
        %259 = vmatprep.subr.mxu0 0.0
        %260 = vmatpush1.msra.mxu0 0.0
        %261 = vmatprep.subr.mxu0 0.0
        %262 = vmatpush1.msra.mxu0 0.0
        %263 = vmatprep.subr.mxu0 0.0
        %264 = vmatpush1.msra.mxu0 0.0
        %265 = vmatprep.subr.mxu0 0.0
        %266 = vmatpush1.msra.mxu0 0.0
        %267 = vmatprep.subr.mxu0 0.0
        %268 = vmatpush1.msra.mxu0 0.0
        %269 = vmatprep.subr.mxu0 0.0
        %270 = vmatpush1.msra.mxu0 0.0
        %271 = vmatprep.subr.mxu0 0.0
        %272 = vmatpush1.msra.mxu0 0.0
        %273 = vmatprep.subr.mxu0 0.0
        %274 = vmatpush1.msra.mxu0 0.0
        %275 = vmatprep.subr.mxu0 0.0
        %276 = vmatpush1.msra.mxu0 0.0
        %277 = vmatprep.subr.mxu0 0.0
        %278 = vmatpush1.msra.mxu0 0.0
        %279 = vmatprep.subr.mxu0 0.0
        %280 = vmatpush1.msra.mxu0 0.0
        %281 = vmatprep.subr.mxu0 0.0
        %282 = vmatpush1.msra.mxu0 0.0
        %283 = vmatprep.subr.mxu0 0.0
        %284 = vmatpush1.msra.mxu0 0.0
        %285 = vmatprep.subr.mxu0 0.0
        %286 = vmatpush1.msra.mxu0 0.0
        %287 = vmatprep.subr.mxu0 0.0
        %288 = vmatpush1.msra.mxu0 0.0
        %289 = vmatprep.subr.mxu0 0.0
        %290 = vmatpush1.msra.mxu0 0.0
        %291 = vmatprep.subr.mxu0 0.0
        %292 = vmatpush1.msra.mxu0 0.0
        %293 = vmatprep.subr.mxu0 0.0
        %294 = vmatpush1.msra.mxu0 0.0
        %295 = vmatprep.subr.mxu0 0.0
        %296 = vmatpush1.msra.mxu0 0.0
        %297 = vmatprep.subr.mxu0 0.0
        %298 = vmatpush1.msra.mxu0 0.0
        %299 = vmatprep.subr.mxu0 0.0
        %300 = vmatpush1.msra.mxu0 0.0
        %301 = vmatprep.subr.mxu0 0.0
        %302 = vmatpush1.msra.mxu0 0.0
        %303 = vmatprep.subr.mxu0 0.0
        %304 = vmatpush1.msra.mxu0 0.0
        %305 = vmatprep.subr.mxu0 0.0
        %306 = vmatpush1.msra.mxu0 0.0
        %307 = vmatprep.mubr.f32.mxu0 0.0
        %308 = vmatmul.mubr.f32.gmra.mrb[0].mxu0 %v241
        %v309 = vpop.f32.mrb[0].mxu0
        %v310 = vadd.f32 0.0, %v309
        %v311 = vpop.f32.mrb[0].mxu0
        %312 = vdwg.mxu0
        %s313 = sld [smem:[#allocation2]]
        %vm314 = vcmask 7168
        %v315 = vsel %vm314, %v310, 0.0
        %v316 = vrot.slane %v315, 4
        %v317 = vadd.f32 %v315, %v316
        %v318 = vrot.slane %v317, 2
        %v319 = vadd.f32 %v317, %v318
        %v320 = vrot.slane %v319, 1
        %v321 = vadd.f32 %v319, %v320
        %v322 = vmul.f32 %v310, 8.0
        %324 = vrot.lane.b32.xlu0 %v321, 1
        %v325 = vpop.permute.xlu0 %324
        %v327 = vadd.f32 %v322, %v325
        %s328 = smul.f32 %s313, 8.0
        %v329 = vstv %s328
        %v330 = vadd.f32 %v327, %v329
        %v331 = vmax.f32 %v330, 1.0
        %v332 = vrsqrt.pop %v331
        %v333 = vld [vmem:[#allocation3] sm:$0xff]
        %v334 = vld [vmem:[#allocation3 + $0x8] sm:$0xff]
        %335 = vmatprep.subr.mxu0 0.0
        %336 = vmatpush1.msra.mxu0 %v333
        %337 = vmatprep.subr.mxu0 0.0
        %338 = vmatpush1.msra.mxu0 %v334
        %339 = vmatprep.subr.mxu0 0.0
        %340 = vmatpush1.msra.mxu0 0.0
        %341 = vmatprep.subr.mxu0 0.0
        %342 = vmatpush1.msra.mxu0 0.0
        %343 = vmatprep.subr.mxu0 0.0
        %344 = vmatpush1.msra.mxu0 0.0
        %345 = vmatprep.subr.mxu0 0.0
        %346 = vmatpush1.msra.mxu0 0.0
        %347 = vmatprep.subr.mxu0 0.0
        %348 = vmatpush1.msra.mxu0 0.0
        %349 = vmatprep.subr.mxu0 0.0
        %350 = vmatpush1.msra.mxu0 0.0
        %351 = vmatprep.subr.mxu0 0.0
        %352 = vmatpush1.msra.mxu0 0.0
        %353 = vmatprep.subr.mxu0 0.0
        %354 = vmatpush1.msra.mxu0 0.0
        %355 = vmatprep.subr.mxu0 0.0
        %356 = vmatpush1.msra.mxu0 0.0
        %357 = vmatprep.subr.mxu0 0.0
        %358 = vmatpush1.msra.mxu0 0.0
        %359 = vmatprep.subr.mxu0 0.0
        %360 = vmatpush1.msra.mxu0 0.0
        %361 = vmatprep.subr.mxu0 0.0
        %362 = vmatpush1.msra.mxu0 0.0
        %363 = vmatprep.subr.mxu0 0.0
        %364 = vmatpush1.msra.mxu0 0.0
        %365 = vmatprep.subr.mxu0 0.0
        %366 = vmatpush1.msra.mxu0 0.0
        %367 = vmatprep.subr.mxu0 0.0
        %368 = vmatpush1.msra.mxu0 0.0
        %369 = vmatprep.subr.mxu0 0.0
        %370 = vmatpush1.msra.mxu0 0.0
        %371 = vmatprep.subr.mxu0 0.0
        %372 = vmatpush1.msra.mxu0 0.0
        %373 = vmatprep.subr.mxu0 0.0
        %374 = vmatpush1.msra.mxu0 0.0
        %375 = vmatprep.subr.mxu0 0.0
        %376 = vmatpush1.msra.mxu0 0.0
        %377 = vmatprep.subr.mxu0 0.0
        %378 = vmatpush1.msra.mxu0 0.0
        %379 = vmatprep.subr.mxu0 0.0
        %380 = vmatpush1.msra.mxu0 0.0
        %381 = vmatprep.subr.mxu0 0.0
        %382 = vmatpush1.msra.mxu0 0.0
        %383 = vmatprep.subr.mxu0 0.0
        %384 = vmatpush1.msra.mxu0 0.0
        %385 = vmatprep.subr.mxu0 0.0
        %386 = vmatpush1.msra.mxu0 0.0
        %387 = vmatprep.subr.mxu0 0.0
        %388 = vmatpush1.msra.mxu0 0.0
        %389 = vmatprep.subr.mxu0 0.0
        %390 = vmatpush1.msra.mxu0 0.0
        %391 = vmatprep.subr.mxu0 0.0
        %392 = vmatpush1.msra.mxu0 0.0
        %393 = vmatprep.subr.mxu0 0.0
        %394 = vmatpush1.msra.mxu0 0.0
        %395 = vmatprep.subr.mxu0 0.0
        %396 = vmatpush1.msra.mxu0 0.0
        %397 = vmatprep.subr.mxu0 0.0
        %398 = vmatpush1.msra.mxu0 0.0
        %399 = vmatprep.mubr.f32.mxu0 0.0
        %400 = vmatmul.mubr.f32.gmra.mrb[0].mxu0 %v241
        %v401 = vpop.f32.mrb[0].mxu0
        %v402 = vadd.f32 0.0, %v401
        %v403 = vpop.f32.mrb[0].mxu0
        %404 = vdwg.mxu0
        %406 = vset.pattern.permute.xlu0 1
        %407 = vperm.xlu0 %406, %v332
        %v408 = vpop.permute.xlu0 %407
        %v410 = vmul.f32 %v408, %v402
        %v411 = vrot.slane %v410, 4
        %v412 = vadd.f32 %v410, %v411
        %v413 = vrot.slane %v412, 2
        %v414 = vadd.f32 %v412, %v413
        %v415 = vrot.slane %v414, 1
        %v416 = vadd.f32 %v414, %v415
        %v417 = vstv %s313
        %v418 = vadd.f32 %v310, %v417
        %420 = vset.pattern.permute.xlu0 0
        %421 = vperm.xlu0 %420, %v418
        %v422 = vpop.permute.xlu0 %421
        %v424 = vmul.f32 %v422, %v410
        %v425 = vrot.slane %v424, 4
        %v426 = vadd.f32 %v424, %v425
        %v427 = vrot.slane %v426, 2
        %v428 = vadd.f32 %v426, %v427
        %v429 = vrot.slane %v428, 1
        %v430 = vadd.f32 %v428, %v429
        %432 = vset.pattern.permute.xlu0 1
        %433 = vperm.xlu0 %432, %v310
        %v434 = vpop.permute.xlu0 %433
        %v436 = vmul.f32 %v434, %v416
        %v437 = vadd.f32 %v436, %v430
        %v438 = vmul.f32 %v408, %v437
        %v439 = vld [vmem:[%s4] sm:$0x1]
        %v441 = vlaneseq
        %v442 = vshrl.u32 %v441, 7
        %v443 = vsub.s32 0, %v442
        %v444 = vrot.slane %v439, %v443
        %v446 = vadd.f32 %v438, %v444
        %v447 = vmax.f32 %v446, 0.0
        %448 = vst [vmem:[%s231] sm:$0xff] %v447
        %s449 = sand.u32 %s139, 1
        %s450 = scalar_lea.sflag [#allocation5], %s449
        %s451 = sand.u32 %s139, 1
        %s452 = smul.addr %s451, 8
        %s453 = scalar_lea.vmem [#allocation6], %s452
        // Predicated region
        $region45: #{tpu_custom_call.1} parent=39 // pred_check
          %p454 = pneg %p149
        $region46: #{tpu_custom_call.1} parent=39 // pred_check_branch
          %456 = sbr.rel (%p454) target = $region48
        $region47: #{tpu_custom_call.1} parent=39 // pred_region
          %s458 = ssub.s32 128, 128
          %459 = vsyncadd %s450, %s458
          %s460 = smul.addr %s21, 128
          %s461 = scalar_lea.hbm %s5, %s460
          %s463 = sshll.u32 %s453, 4
          %s464 = int_to_ptr.vmem [resolvable:$true] %s463
          %466 = dma.vmem_to_hbm [thread:$0]  %s464, 128, %s461, %s450
        $region48: #{tpu_custom_call.1} parent=39 // pred_fallthru
          _
      $region40: #{tpu_custom_call.1} parent=5 // pred_fallthru
        _
      %p467 = scmp.le.s32.totalorder 2, %s16
      // Predicated region
      $region49: #{tpu_custom_call.1} parent=5 // pred_check
        %p468 = pneg %p467
      $region50: #{tpu_custom_call.1} parent=5 // pred_check_branch
        %470 = sbr.rel (%p468) target = $region52
      $region51: #{tpu_custom_call.1} parent=5 // pred_region
        %s471 = ssub.s32 %s16, 2
        // Predicated region
        $region53: #{tpu_custom_call.1} parent=51 // pred_check
          %p472 = pneg %p155
        $region54: #{tpu_custom_call.1} parent=51 // pred_check_branch
          %474 = sbr.rel (%p472) target = $region56
        $region55: #{tpu_custom_call.1} parent=51 // pred_region
          %s475 = sand.u32 %s140, 1
          %s476 = scalar_lea.sflag [#allocation5], %s475
          %s477 = sand.u32 %s140, 1
          %s478 = smul.addr %s477, 8
          %s479 = scalar_lea.vmem [#allocation6], %s478
          %480 = dma.done %s476, 128
        $region56: #{tpu_custom_call.1} parent=51 // pred_fallthru
          _
      $region52: #{tpu_custom_call.1} parent=5 // pred_fallthru
        _
    $region6: #{tpu_custom_call.1} parent=1 // loop_footer
      %s20 = sadd.s32 1, %s16
    $region7: #{tpu_custom_call.1} parent=1 // loop_footer_branch
      %15 = sbr.rel target = $region3
    $region8: #{tpu_custom_call.1} parent=1 // loop_exit
      _
    %481 = vsyncpa [#allocation4], 1
    %s482 = scalar_lea.sflag [#allocation4], 1
    %483 = vsyncpa %s482, 1
    %484 = vsyncpa [#allocation5], 1
    %s485 = scalar_lea.sflag [#allocation5], 1
    %486 = vsyncpa %s485, 1

</llo_original>
